<compile_context>
chip_gen: v6e
topology: v6e:2x2x1
jax: 0.10.0
libtpu: 0.0.40
codegen_flags: <defaults>
</compile_context>

<pallas_src>
import functools

import jax
import jax.numpy as jnp
from jax.experimental import pallas as pl
from jax.experimental.pallas import tpu as pltpu


def _round_up(v, m):
    return (v + m - 1) // m * m


def _varpool1d_kernel(x_ref, out_ref, *, kernel_size, stride, rows_per_block):
    # x_ref:   (L_in_pad, NC_TILE)      -- full padded length for this lane tile
    # out_ref: (rows_per_block, NC_TILE) -- one dense, (8,128)-aligned output tile
    base = pl.multiple_of(pl.program_id(1) * (rows_per_block * stride), 8)

    def window(t):
        if stride == 1:
            idx = pl.ds(base + t, rows_per_block)
        else:
            idx = pl.ds(base + t, rows_per_block, stride=stride)
        return x_ref[idx, :].astype(jnp.float32)

    # Static unroll over kernel_size: LLO scheduler sees every load/add.
    w = window(0)
    acc = w
    acc_sq = w * w
    for t in range(1, kernel_size):
        w = window(t)
        acc = acc + w
        acc_sq = acc_sq + w * w

    inv_k = jnp.float32(1.0 / kernel_size)
    mean = acc * inv_k
    # Exactly matches avg_pool1d(x^2) - avg_pool1d(x)^2 (no clamp, to preserve
    # the module's semantics; may be tiny-negative due to f32 cancellation).
    var = acc_sq * inv_k - mean * mean
    out_ref[...] = var.astype(out_ref.dtype)


def _choose_lout_tile(l_out):
    """Largest power-of-two L_out tile (<=256) with modest padding waste."""
    cap = _round_up(l_out, 8)
    slack = max(l_out // 8, 8)
    for cand in (256, 128, 64, 32, 16, 8):
        if cand > cap:
            continue
        padded = _round_up(l_out, cand)
        if padded - l_out <= slack or cand == 8:
            return cand, padded
    return 8, _round_up(l_out, 8)


def _choose_nc_tile(nc_pad, l_in_pad, lout_tile, in_bytes, out_bytes, budget):
    """Largest lane tile (multiple of 128, divides nc_pad) within the VMEM budget."""
    def footprint(cand):
        return (2 * l_in_pad * cand * in_bytes          # double-buffered input block
                + 2 * lout_tile * cand * out_bytes      # double-buffered output block
                + 6 * lout_tile * cand * 4)             # f32 accumulators / temporaries
    for cand in (512, 256, 128):
        if nc_pad % cand == 0 and footprint(cand) <= budget:
            return cand, footprint(cand)
    return 128, footprint(128)


def var_pool1d(x, kernel_size, stride=None, padding=0):
    """x: (N, C, L) float array. Returns (N, C, L_out)."""
    if stride is None:
        stride = kernel_size
    n, c, length = x.shape
    nc = n * c
    l_logical = length + 2 * padding
    assert kernel_size <= l_logical, "kernel larger than padded input"
    l_out = (l_logical - kernel_size) // stride + 1
    assert l_out >= 1, "output length must be >= 1"

    nc_pad = _round_up(nc, 128)
    lout_tile, l_out_pad = _choose_lout_tile(l_out)
    l_in_pad = _round_up(max(l_logical, (l_out_pad - 1) * stride + kernel_size), 8)

    in_bytes = jnp.dtype(x.dtype).itemsize
    nc_tile, fp = _choose_nc_tile(
        nc_pad, l_in_pad, lout_tile, in_bytes, in_bytes, budget=24 * 2**20
    )
    vmem_limit = int(min(100 * 2**20, max(32 * 2**20, fp + 8 * 2**20)))

    # (N, C, L) -> (L, N*C); one fused zero-pad supplies both the avg_pool
    # `padding` (count_include_pad=True) and the tile-alignment padding.
    x_t = jnp.transpose(x, (2, 0, 1)).reshape(length, nc)
    x_t = jnp.pad(x_t, ((padding, l_in_pad - length - padding), (0, nc_pad - nc)))

    grid = (nc_pad // nc_tile, l_out_pad // lout_tile)  # NC outer, L_out inner:
    # the input block index is constant along the inner axis -> fetched once
    # per lane tile; output tiles stream out every step (pipelined writeback).

    kernel = functools.partial(
        _varpool1d_kernel,
        kernel_size=kernel_size,
        stride=stride,
        rows_per_block=lout_tile,
    )

    out_t = pl.pallas_call(
        kernel,
        out_shape=jax.ShapeDtypeStruct((l_out_pad, nc_pad), x.dtype),
        grid=grid,
        in_specs=[pl.BlockSpec((l_in_pad, nc_tile), lambda i, j: (0, i))],
        out_specs=pl.BlockSpec((lout_tile, nc_tile), lambda i, j: (j, i)),
        compiler_params=pltpu.CompilerParams(
            dimension_semantics=("parallel", "parallel"),
            vmem_limit_bytes=vmem_limit,
        ),
    )(x_t)

    out = out_t[:l_out, :nc].reshape(l_out, n, c)
    return jnp.transpose(out, (1, 2, 0))


def _var_pool1d_ref(x, kernel_size, stride, padding):
    """Pure-JAX reference matching F.avg_pool1d semantics (count_include_pad=True)."""
    x_p = jnp.pad(x, ((0, 0), (0, 0), (padding, padding)))
    l_padded = x_p.shape[-1]
    l_out = (l_padded - kernel_size) // stride + 1
    idx = jnp.arange(l_out)[:, None] * stride + jnp.arange(kernel_size)[None, :]
    win = x_p[:, :, idx]                          # (N, C, L_out, k)
    mean = jnp.mean(win, axis=-1)
    mean_sq = jnp.mean(win * win, axis=-1)
    return mean_sq - mean * mean


if __name__ == "__main__":
    key = jax.random.PRNGKey(0)
    k1, k2 = jax.random.split(key)

    # Small case (matches the module's typical tiny smoke shape).
    N, C, L = 2, 4, 16
    kernel_size, stride, padding = 4, 2, 1
    x = jax.random.normal(k1, (N, C, L), dtype=jnp.float32)
    out = jax.block_until_ready(var_pool1d(x, kernel_size, stride, padding))
    ref = _var_pool1d_ref(x, kernel_size, stride, padding)
    assert out.shape == ref.shape, (out.shape, ref.shape)
    assert jnp.allclose(out, ref, atol=1e-5, rtol=1e-5), "mismatch vs reference (small)"

    # Slightly larger case: exercises NC lane padding, L_out tiling (grid > 1),
    # non-divisible L_out, and non-unit / non-default stride.
    N2, C2, L2 = 2, 96, 1000
    k2_, s2, p2 = 5, 3, 2
    x2 = jax.random.normal(k2, (N2, C2, L2), dtype=jnp.float32)
    out2 = jax.block_until_ready(var_pool1d(x2, k2_, s2, p2))
    ref2 = _var_pool1d_ref(x2, k2_, s2, p2)
    assert out2.shape == ref2.shape, (out2.shape, ref2.shape)
    assert jnp.allclose(out2, ref2, atol=2e-5, rtol=1e-5), "mismatch vs reference (large)"

    print("KERNEL_OK")
</pallas_src>

<mosaic_0001>
module attributes {stable_mosaic.version = 11 : i64} {
  func.func @_varpool1d_kernel(%arg0: i32, %arg1: i32, %arg2: memref<24x128xf32, #tpu.memory_space<vmem>>, %arg3: memref<8x128xf32, #tpu.memory_space<vmem>>) attributes {dimension_semantics = [#tpu.dimension_semantics<parallel>, #tpu.dimension_semantics<parallel>], iteration_bounds = array<i64: 1, 1>, scalar_prefetch = 0 : i64, scratch_operands = 0 : i64, tpu.core_type = #tpu.core_type<tc>, window_params = [{transform_indices = @transform_0, window_bounds = array<i64: 24, 128>}, {transform_indices = @transform_1, window_bounds = array<i64: 8, 128>}]} {
    %c16_i32 = arith.constant 16 : i32
    %0 = arith.muli %arg1, %c16_i32 : i32
    %1 = tpu.assume_multiple %0, 8 : i32
    %c0_i32 = arith.constant 0 : i32
    %2 = arith.addi %1, %c0_i32 : i32
    %3 = arith.index_cast %2 : i32 to index
    %c0 = arith.constant 0 : index
    %4 = tpu.strided_load %arg2[%3, %c0] {strides = array<i32: 2, 1>} : memref<24x128xf32, #tpu.memory_space<vmem>>, vector<8x128xf32>
    %5 = arith.mulf %4, %4 : vector<8x128xf32>
    %c1_i32 = arith.constant 1 : i32
    %6 = arith.addi %1, %c1_i32 : i32
    %7 = arith.index_cast %6 : i32 to index
    %c0_0 = arith.constant 0 : index
    %8 = tpu.strided_load %arg2[%7, %c0_0] {strides = array<i32: 2, 1>} : memref<24x128xf32, #tpu.memory_space<vmem>>, vector<8x128xf32>
    %9 = arith.addf %4, %8 : vector<8x128xf32>
    %10 = arith.mulf %8, %8 : vector<8x128xf32>
    %11 = arith.addf %5, %10 : vector<8x128xf32>
    %c2_i32 = arith.constant 2 : i32
    %12 = arith.addi %1, %c2_i32 : i32
    %13 = arith.index_cast %12 : i32 to index
    %c0_1 = arith.constant 0 : index
    %14 = tpu.strided_load %arg2[%13, %c0_1] {strides = array<i32: 2, 1>} : memref<24x128xf32, #tpu.memory_space<vmem>>, vector<8x128xf32>
    %15 = arith.addf %9, %14 : vector<8x128xf32>
    %16 = arith.mulf %14, %14 : vector<8x128xf32>
    %17 = arith.addf %11, %16 : vector<8x128xf32>
    %c3_i32 = arith.constant 3 : i32
    %18 = arith.addi %1, %c3_i32 : i32
    %19 = arith.index_cast %18 : i32 to index
    %c0_2 = arith.constant 0 : index
    %20 = tpu.strided_load %arg2[%19, %c0_2] {strides = array<i32: 2, 1>} : memref<24x128xf32, #tpu.memory_space<vmem>>, vector<8x128xf32>
    %21 = arith.addf %15, %20 : vector<8x128xf32>
    %22 = arith.mulf %20, %20 : vector<8x128xf32>
    %23 = arith.addf %17, %22 : vector<8x128xf32>
    %cst = arith.constant 2.500000e-01 : f32
    %24 = vector.broadcast %cst : f32 to vector<8x128xf32>
    %25 = arith.mulf %21, %24 : vector<8x128xf32>
    %cst_3 = arith.constant 2.500000e-01 : f32
    %26 = vector.broadcast %cst_3 : f32 to vector<8x128xf32>
    %27 = arith.mulf %23, %26 : vector<8x128xf32>
    %28 = arith.mulf %25, %25 : vector<8x128xf32>
    %29 = arith.subf %27, %28 : vector<8x128xf32>
    %c0_4 = arith.constant 0 : index
    %c0_5 = arith.constant 0 : index
    %30 = vector.load %arg3[%c0_4, %c0_5] : memref<8x128xf32, #tpu.memory_space<vmem>>, vector<8x128xf32>
    tpu.vector_store %arg3[%c0_4, %c0_5], %29 {strides = array<i32>} : memref<8x128xf32, #tpu.memory_space<vmem>>, vector<8x128xf32>,
    return
  }
  func.func @transform_0(%arg0: i32, %arg1: i32) -> (i32, i32) {
    %c0_i32 = arith.constant 0 : i32
    %c0_i32_0 = arith.constant 0 : i32
    return %c0_i32, %arg0 : i32, i32
  }
  func.func @transform_1(%arg0: i32, %arg1: i32) -> (i32, i32) {
    %c0_i32 = arith.constant 0 : i32
    return %arg1, %arg0 : i32, i32
  }
}

</mosaic_0001>

<llo_original>
// kernel: tpu_custom_call.1
$region0: #{tpu_custom_call.1}
  #allocation0 [shape = 'u32[]', space=smem, size = 0x4, offset = 0x4, fixed_abs, tag = 'smem constant byte address 0x4 - core index']
  #allocation1 [shape = 'u32[144,128]{1,0:T(1,128)}', space=vmem, size = 0x12000, scoped, tag = 'internal scratch']
  %s0 = inlined_call_operand.hbm [shape: f32[24,128], index: 0, kind: input, shape index: {}]
  %s1 = inlined_call_operand.hbm [shape: f32[8,128], index: 1, kind: output, shape index: {}]
  %s2 = sld [smem:[#allocation0]]
  $region18: #{tpu_custom_call.1} parent=0
    _
  %s4 = ssub.s32 1, %s2
  %s5 = scalar_select 0, %s4, %s2
  $region1: #{tpu_custom_call.1} parent=0
    #allocation2 [shape = 'u8[12288]{0}', space=vmem, size = 0x3000, scoped, tag = 'input window, operand 0, single buffered']
    #allocation3 [shape = 's32[1]{0}', space=sflag, size = 0x4, scoped, tag = 'scoped memory for tpu_custom_call.1']
    #allocation4 [shape = 's32[1]{0}', space=sflag, size = 0x4, scoped, tag = 'scoped memory for tpu_custom_call.1']
    #allocation5 [shape = 'u8[4096]{0}', space=vmem, size = 0x1000, scoped, tag = 'output window, operand 0, single buffered']
    %6 = vsyncpa [#allocation3], 0
    %7 = vsyncpa [#allocation4], 0
    // Predicated region
    $region2: #{tpu_custom_call.1} parent=1 // pred_check
      _
    $region3: #{tpu_custom_call.1} parent=1 // pred_check_branch
      %9 = sbr.rel (0) target = $region5
    $region4: #{tpu_custom_call.1} parent=1 // pred_region
      %s11 = ssub.s32 384, 384
      %12 = vsyncadd [#allocation3], %s11
      %s13 = sshll.u32 [#allocation2], 4
      %s14 = int_to_ptr.vmem [resolvable:$true] %s13
      %19 = dma.hbm_to_vmem [thread:$0]  %s0, 384, %s14, [#allocation3], 128, 128, 8
    $region5: #{tpu_custom_call.1} parent=1 // pred_fallthru
      _
    // Predicated region
    $region6: #{tpu_custom_call.1} parent=1 // pred_check
      _
    $region7: #{tpu_custom_call.1} parent=1 // pred_check_branch
      %21 = sbr.rel (0) target = $region9
    $region8: #{tpu_custom_call.1} parent=1 // pred_region
      %22 = dma.done [#allocation3], 384
    $region9: #{tpu_custom_call.1} parent=1 // pred_fallthru
      _
    %s23 = smul.u32 0, 16
    %s24 = scalar_lea.vmem [#allocation2], %s23
    %v25 = vld [vmem:[%s24] ss:$2 sm:$0xff]
    %v26 = vmul.f32 %v25, %v25
    %s27 = sadd.s32 %s23, 1
    %s28 = scalar_lea.vmem [#allocation2], %s27
    %v29 = vld [vmem:[%s28] ss:$2 sm:$0xff]
    %v30 = vadd.f32 %v25, %v29
    %v31 = vmul.f32 %v29, %v29
    %v32 = vadd.f32 %v26, %v31
    %s33 = sadd.s32 %s23, 2
    %s34 = scalar_lea.vmem [#allocation2], %s33
    %v35 = vld [vmem:[%s34] ss:$2 sm:$0xff]
    %v36 = vadd.f32 %v30, %v35
    %v37 = vmul.f32 %v35, %v35
    %v38 = vadd.f32 %v32, %v37
    %s39 = sadd.s32 %s23, 3
    %s40 = scalar_lea.vmem [#allocation2], %s39
    %v41 = vld [vmem:[%s40] ss:$2 sm:$0xff]
    %v42 = vadd.f32 %v36, %v41
    %v43 = vmul.f32 %v41, %v41
    %v44 = vadd.f32 %v38, %v43
    %v45 = vmul.f32 %v42, 0.25
    %v46 = vmul.f32 %v44, 0.25
    %v47 = vmul.f32 %v45, %v45
    %v48 = vsub.f32 %v46, %v47
    %49 = vst [vmem:[#allocation5] sm:$0xff] %v48
    // Predicated region
    $region10: #{tpu_custom_call.1} parent=1 // pred_check
      _
    $region11: #{tpu_custom_call.1} parent=1 // pred_check_branch
      %51 = sbr.rel (0) target = $region13
    $region12: #{tpu_custom_call.1} parent=1 // pred_region
      %s53 = ssub.s32 128, 128
      %54 = vsyncadd [#allocation4], %s53
      %s56 = sshll.u32 [#allocation5], 4
      %s57 = int_to_ptr.vmem [resolvable:$true] %s56
      %59 = dma.vmem_to_hbm [thread:$0]  %s57, 128, %s1, [#allocation4]
    $region13: #{tpu_custom_call.1} parent=1 // pred_fallthru
      _
    // Predicated region
    $region14: #{tpu_custom_call.1} parent=1 // pred_check
      _
    $region15: #{tpu_custom_call.1} parent=1 // pred_check_branch
      %61 = sbr.rel (0) target = $region17
    $region16: #{tpu_custom_call.1} parent=1 // pred_region
      %62 = dma.done [#allocation4], 128
    $region17: #{tpu_custom_call.1} parent=1 // pred_fallthru
      _
    %63 = vsyncpa [#allocation3], 1
    %64 = vsyncpa [#allocation4], 1

</llo_original>
